<compile_context>
chip_gen: v7x
topology: tpu7x:2x2x1
jax: 0.10.0
libtpu: 0.0.40
codegen_flags: <defaults>
</compile_context>

<pallas_src>
import functools

import jax
import jax.numpy as jnp
from jax.experimental import pallas as pl
from jax.experimental.pallas import tpu as pltpu


# ----------------------------------------------------------------------------
# Pallas kernel: fused (input activation -> bf16 matmul -> affine -> tanh)
# ----------------------------------------------------------------------------
def _fused_kernel(p_ref, w_ref, s_ref, b_ref, o_ref, *, in_act, out_act):
    x = p_ref[...].reshape(p_ref.shape[-2:])        # (TM, Kd)  bf16
    w = w_ref[...].reshape(w_ref.shape[-2:])        # (Kd, Cout) bf16
    if in_act == "lrelu":            # LeakyReLU(0.2) applied to the conv INPUT
        x = jnp.where(x >= 0, x, x * jnp.asarray(0.2, x.dtype))
    elif in_act == "relu":
        x = jnp.maximum(x, jnp.asarray(0, x.dtype))
    y = jnp.dot(x, w, preferred_element_type=jnp.float32)
    y = y * s_ref[...] + b_ref[...]                 # bias + eval-mode BN (f32)
    if out_act == "tanh":
        y = jnp.tanh(y)
    o_ref[...] = y.astype(o_ref.dtype).reshape(o_ref.shape)


def _round_up(x, m):
    return ((x + m - 1) // m) * m


def _pick_tm(M, Kd):
    """Row-tile size: as large as possible while the bf16 patch tile <= ~4 MiB."""
    m8 = _round_up(M, 8)
    cap = max(8, (4 * 1024 * 1024) // (2 * Kd))
    tm = 8
    for c in (1024, 512, 256, 128, 64, 32, 16, 8):
        if c <= m8 and c <= cap:
            tm = c
            break
    mp = _round_up(M, tm)
    return tm, mp


_COMPILER_PARAMS = pltpu.CompilerParams(
    dimension_semantics=None,  # set per call
    vmem_limit_bytes=32 * 1024 * 1024,
)


def fused_patch_matmul(patches, w, scale, shift, in_act, out_act, out_dtype):
    """patches: (M, Kd), w: (Kd, Cout), scale/shift: (Cout,)."""
    M, Kd = patches.shape
    Cout = w.shape[-1]
    TM, Mp = _pick_tm(M, Kd)
    if Mp != M:                       # only tiny layers / odd sizes hit this
        patches = jnp.pad(patches, ((0, Mp - M), (0, 0)))
    scale2 = scale.reshape(1, Cout).astype(jnp.float32)
    shift2 = shift.reshape(1, Cout).astype(jnp.float32)

    out = pl.pallas_call(
        functools.partial(_fused_kernel, in_act=in_act, out_act=out_act),
        out_shape=jax.ShapeDtypeStruct((Mp, Cout), out_dtype),
        grid_spec=pltpu.PrefetchScalarGridSpec(
            num_scalar_prefetch=0,
            grid=(Mp // TM,),
            in_specs=[
                pl.BlockSpec((TM, Kd), lambda i: (i, 0)),
                pl.BlockSpec((Kd, Cout), lambda i: (0, 0)),
                pl.BlockSpec((1, Cout), lambda i: (0, 0)),
                pl.BlockSpec((1, Cout), lambda i: (0, 0)),
            ],
            out_specs=pl.BlockSpec((TM, Cout), lambda i: (i, 0)),
        ),
        compiler_params=pltpu.CompilerParams(
            dimension_semantics=("parallel",),
            vmem_limit_bytes=32 * 1024 * 1024),
        cost_estimate=pl.CostEstimate(
            flops=2 * Mp * Kd * Cout,
            transcendentals=Mp * Cout if out_act == "tanh" else 0,
            bytes_accessed=Mp * Kd * 2 + Kd * Cout * 2
            + Mp * Cout * jnp.dtype(out_dtype).itemsize),
    )(patches.astype(jnp.bfloat16), w.astype(jnp.bfloat16), scale2, shift2)
    return out[:M]


def fused_phase_matmul(patches4, w4, scale, shift, in_act, out_act, out_dtype):
    """4-phase deconv: patches4 (4, M, Kd), w4 (4, Kd, Cout) -> (4, M, Cout)."""
    P, M, Kd = patches4.shape
    Cout = w4.shape[-1]
    TM, Mp = _pick_tm(M, Kd)
    if Mp != M:
        patches4 = jnp.pad(patches4, ((0, 0), (0, Mp - M), (0, 0)))
    scale2 = scale.reshape(1, Cout).astype(jnp.float32)
    shift2 = shift.reshape(1, Cout).astype(jnp.float32)

    out = pl.pallas_call(
        functools.partial(_fused_kernel, in_act=in_act, out_act=out_act),
        out_shape=jax.ShapeDtypeStruct((P, Mp, Cout), out_dtype),
        grid_spec=pltpu.PrefetchScalarGridSpec(
            num_scalar_prefetch=0,
            grid=(P, Mp // TM),
            in_specs=[
                pl.BlockSpec((1, TM, Kd), lambda p, i: (p, i, 0)),
                pl.BlockSpec((1, Kd, Cout), lambda p, i: (p, 0, 0)),
                pl.BlockSpec((1, Cout), lambda p, i: (0, 0)),
                pl.BlockSpec((1, Cout), lambda p, i: (0, 0)),
            ],
            out_specs=pl.BlockSpec((1, TM, Cout), lambda p, i: (p, i, 0)),
        ),
        compiler_params=pltpu.CompilerParams(
            dimension_semantics=("parallel", "parallel"),
            vmem_limit_bytes=32 * 1024 * 1024),
        cost_estimate=pl.CostEstimate(
            flops=2 * P * Mp * Kd * Cout,
            transcendentals=P * Mp * Cout if out_act == "tanh" else 0,
            bytes_accessed=P * Mp * Kd * 2 + P * Kd * Cout * 2
            + P * Mp * Cout * jnp.dtype(out_dtype).itemsize),
    )(patches4.astype(jnp.bfloat16), w4.astype(jnp.bfloat16), scale2, shift2)
    return out[:, :M]


# ----------------------------------------------------------------------------
# JAX glue: NHWC patch extraction (data movement only, stays in bf16)
# ----------------------------------------------------------------------------
def extract_patches_nhwc(x, ksize, stride, pad):
    """x: (N,H,W,C) -> (N*Ho*Wo, k*k*C); flattening order (kh, kw, C)."""
    N, H, W, C = x.shape
    xp = jnp.pad(x, ((0, 0), (pad, pad), (pad, pad), (0, 0)))
    Ho = (H + 2 * pad - ksize) // stride + 1
    Wo = (W + 2 * pad - ksize) // stride + 1
    taps = []
    for i in range(ksize):
        for j in range(ksize):
            taps.append(xp[:, i:i + stride * Ho:stride, j:j + stride * Wo:stride, :])
    p = jnp.concatenate(taps, axis=-1)              # (N, Ho, Wo, k*k*C)
    return p.reshape(N * Ho * Wo, ksize * ksize * C), (N, Ho, Wo)


def conv2d(x, w, scale, shift, in_act, out_act="none", out_dtype=jnp.bfloat16):
    """Conv2d(k=4, s=2, p=1); x NHWC, w (Cout, Cin, 4, 4) PyTorch OIHW."""
    Cout, Cin, kh, kw = w.shape
    patches, (N, Ho, Wo) = extract_patches_nhwc(x, kh, 2, 1)
    wm = jnp.transpose(w, (2, 3, 1, 0)).reshape(kh * kw * Cin, Cout)
    y = fused_patch_matmul(patches, wm, scale, shift, in_act, out_act, out_dtype)
    return y.reshape(N, Ho, Wo, Cout)


# For output parity r (and s), the contributing kernel rows (cols), in window
# order a (b) = 0, 1:  y[2p+0] = x[p-1]*w[3] + x[p]*w[1];  y[2p+1] = x[p]*w[2] + x[p+1]*w[0]
_TAP_SEL = ([3, 1], [2, 0])


def conv_transpose2d(x, w, scale, shift, in_act, out_act="none",
                     out_dtype=jnp.bfloat16):
    """ConvTranspose2d(k=4, s=2, p=1); x NHWC, w (Cin, Cout, 4, 4) PyTorch layout.

    Sub-pixel decomposition: each output parity (r, s) is a stride-1 2x2 conv of
    the 1-padded input; the 4 phases are batched on a leading grid axis.
    (ReLU/LeakyReLU of the zero padding is zero, so applying the input
    activation inside the kernel on the patches is exact.)
    """
    Cin, Cout, kh, kw = w.shape
    N, H, W, _ = x.shape
    xp = jnp.pad(x, ((0, 0), (1, 1), (1, 1), (0, 0)))
    patch_list, w_list = [], []
    for r in (0, 1):
        for s in (0, 1):
            taps = []
            for a in (0, 1):
                for b in (0, 1):
                    taps.append(xp[:, r + a:r + a + H, s + b:s + b + W, :])
            patch_list.append(
                jnp.concatenate(taps, axis=-1).reshape(N * H * W, 4 * Cin))
            wsel = w[:, :, _TAP_SEL[r], :][..., _TAP_SEL[s]]    # (Cin,Cout,2,2)
            w_list.append(
                jnp.transpose(wsel, (2, 3, 0, 1)).reshape(4 * Cin, Cout))
    patches4 = jnp.stack(patch_list, axis=0)                    # (4, M, 4*Cin)
    w4 = jnp.stack(w_list, axis=0)                              # (4, 4*Cin, Cout)
    y4 = fused_phase_matmul(patches4, w4, scale, shift, in_act, out_act, out_dtype)
    # interleave phases: (4=2r+s, N*H*W, Cout) -> (N, 2H, 2W, Cout)
    y = y4.reshape(2, 2, N, H, W, Cout).transpose(2, 3, 0, 4, 1, 5)
    return y.reshape(N, 2 * H, 2 * W, Cout)


# ----------------------------------------------------------------------------
# Parameters (deterministic synthetic init) and forward pass
# ----------------------------------------------------------------------------
def init_params(key, K):
    keys = iter(jax.random.split(key, 64))
    P = {}

    def nrm(shape, sdev=0.05):
        return jax.random.normal(next(keys), shape, jnp.float32) * sdev

    conv_specs = [("conv1", 15, K), ("conv2", K, 2 * K), ("conv3", 2 * K, 4 * K),
                  ("conv4", 4 * K, 8 * K), ("conv5", 8 * K, 8 * K),
                  ("conv6", 8 * K, 8 * K), ("conv7", 8 * K, 8 * K),
                  ("conv8", 8 * K, 8 * K)]
    for name, cin, cout in conv_specs:
        P[name + "_w"] = nrm((cout, cin, 4, 4))
        P[name + "_b"] = nrm((cout,), 0.01)

    deconv_specs = [("deconv1", 8 * K, 8 * K), ("deconv2", 16 * K, 8 * K),
                    ("deconv3", 16 * K, 8 * K), ("deconv4", 16 * K, 8 * K),
                    ("deconv5", 16 * K, 4 * K), ("deconv6", 8 * K, 2 * K),
                    ("deconv7", 4 * K, K), ("deconv8", 2 * K, 3)]
    for name, cin, cout in deconv_specs:
        P[name + "_w"] = nrm((cin, cout, 4, 4))
        P[name + "_b"] = nrm((cout,), 0.01)

    for name, c in [("bn", K), ("bn2", 2 * K), ("bn4", 4 * K), ("bn8", 8 * K)]:
        P[name + "_g"] = 1.0 + nrm((c,), 0.1)
        P[name + "_b"] = nrm((c,), 0.1)
        P[name + "_m"] = nrm((c,), 0.1)
        P[name + "_v"] = 1.0 + jnp.abs(nrm((c,), 0.1))
    return P


def unet_gi_forward(x_nchw, P, K):
    ones = lambda c: jnp.ones((c,), jnp.float32)

    def bn_fold(pref, bias, eps=1e-5):
        g, b, m, v = P[pref + "_g"], P[pref + "_b"], P[pref + "_m"], P[pref + "_v"]
        scale = g / jnp.sqrt(v + eps)
        return scale, b + scale * (bias - m)

    x = jnp.transpose(x_nchw, (0, 2, 3, 1)).astype(jnp.bfloat16)   # NHWC bf16

    # ---------------- encoder ----------------
    e1 = conv2d(x,  P["conv1_w"], ones(K),            P["conv1_b"], "none")
    e2 = conv2d(e1, P["conv2_w"], *bn_fold("bn2", P["conv2_b"]), in_act="lrelu")
    e3 = conv2d(e2, P["conv3_w"], *bn_fold("bn4", P["conv3_b"]), in_act="lrelu")
    e4 = conv2d(e3, P["conv4_w"], *bn_fold("bn8", P["conv4_b"]), in_act="lrelu")
    e5 = conv2d(e4, P["conv5_w"], *bn_fold("bn8", P["conv5_b"]), in_act="lrelu")
    e6 = conv2d(e5, P["conv6_w"], *bn_fold("bn8", P["conv6_b"]), in_act="lrelu")
    e7 = conv2d(e6, P["conv7_w"], *bn_fold("bn8", P["conv7_b"]), in_act="lrelu")
    e8 = conv2d(e7, P["conv8_w"], ones(8 * K),         P["conv8_b"], "lrelu")

    # ---------------- decoder (dropout = identity in eval mode) -------------
    d1 = conv_transpose2d(e8, P["deconv1_w"], *bn_fold("bn8", P["deconv1_b"]), in_act="relu")
    d1 = jnp.concatenate([d1, e7], axis=-1)
    d2 = conv_transpose2d(d1, P["deconv2_w"], *bn_fold("bn8", P["deconv2_b"]), in_act="relu")
    d2 = jnp.concatenate([d2, e6], axis=-1)
    d3 = conv_transpose2d(d2, P["deconv3_w"], *bn_fold("bn8", P["deconv3_b"]), in_act="relu")
    d3 = jnp.concatenate([d3, e5], axis=-1)
    d4 = conv_transpose2d(d3, P["deconv4_w"], *bn_fold("bn8", P["deconv4_b"]), in_act="relu")
    d4 = jnp.concatenate([d4, e4], axis=-1)
    d5 = conv_transpose2d(d4, P["deconv5_w"], *bn_fold("bn4", P["deconv5_b"]), in_act="relu")
    d5 = jnp.concatenate([d5, e3], axis=-1)
    d6 = conv_transpose2d(d5, P["deconv6_w"], *bn_fold("bn2", P["deconv6_b"]), in_act="relu")
    d6 = jnp.concatenate([d6, e2], axis=-1)
    d7 = conv_transpose2d(d6, P["deconv7_w"], *bn_fold("bn",  P["deconv7_b"]), in_act="relu")
    d7 = jnp.concatenate([d7, e1], axis=-1)
    d8 = conv_transpose2d(d7, P["deconv8_w"], jnp.ones((3,), jnp.float32),
                          P["deconv8_b"], in_act="relu", out_act="tanh",
                          out_dtype=jnp.float32)
    return jnp.transpose(d8, (0, 3, 1, 2))                          # back to NCHW


# ----------------------------------------------------------------------------
# main
# ----------------------------------------------------------------------------
if __name__ == "__main__":
    key = jax.random.PRNGKey(0)
    pkey, xkey, ck1, ck2 = jax.random.split(key, 4)

    # Small config: K=8 (module default is 32); the 8-level stride-2 U-Net needs
    # 256x256 input so the bottleneck reaches 1x1.
    K = 8
    N, CIN, H, W = 1, 15, 256, 256
    params = init_params(pkey, K)
    x = jax.random.normal(xkey, (N, CIN, H, W), jnp.float32)

    # --- sanity: Pallas conv path vs XLA conv (bf16-rounded inputs, f32 acc) ---
    xs = jax.random.normal(ck1, (1, 15, 16, 16), jnp.float32)
    xs_b = xs.astype(jnp.bfloat16).astype(jnp.float32)
    w_b = params["conv1_w"].astype(jnp.bfloat16).astype(jnp.float32)
    got = conv2d(jnp.transpose(xs, (0, 2, 3, 1)).astype(jnp.bfloat16),
                 params["conv1_w"], jnp.ones((K,), jnp.float32),
                 params["conv1_b"], "none", out_dtype=jnp.float32)
    got = jnp.transpose(got, (0, 3, 1, 2))
    ref = jax.lax.conv_general_dilated(
        xs_b, w_b, window_strides=(2, 2), padding=((1, 1), (1, 1)),
        dimension_numbers=("NCHW", "OIHW", "NCHW"),
    ) + params["conv1_b"][None, :, None, None]
    assert jnp.allclose(got, ref, atol=5e-3, rtol=5e-3)

    # --- sanity: 4-phase transposed-conv path vs XLA conv with lhs_dilation ---
    xt = jax.random.normal(ck2, (1, 8 * K, 4, 4), jnp.float32)
    xt_b = xt.astype(jnp.bfloat16).astype(jnp.float32)
    wt_b = params["deconv1_w"].astype(jnp.bfloat16).astype(jnp.float32)
    got_t = conv_transpose2d(jnp.transpose(xt, (0, 2, 3, 1)).astype(jnp.bfloat16),
                             params["deconv1_w"], jnp.ones((8 * K,), jnp.float32),
                             params["deconv1_b"], "none", out_dtype=jnp.float32)
    got_t = jnp.transpose(got_t, (0, 3, 1, 2))
    w_eq = jnp.transpose(wt_b, (1, 0, 2, 3))[:, :, ::-1, ::-1]
    ref_t = jax.lax.conv_general_dilated(
        xt_b, w_eq, window_strides=(1, 1), padding=((2, 2), (2, 2)),
        lhs_dilation=(2, 2), dimension_numbers=("NCHW", "OIHW", "NCHW"),
    ) + params["deconv1_b"][None, :, None, None]
    assert jnp.allclose(got_t, ref_t, atol=5e-3, rtol=5e-3)

    # --- full forward pass ---
    fwd = jax.jit(lambda xx, pp: unet_gi_forward(xx, pp, K))
    y = jax.block_until_ready(fwd(x, params))

    assert y.shape == (N, 3, H, W), y.shape
    assert bool(jnp.all(jnp.isfinite(y)))
    assert bool(jnp.all(jnp.abs(y) <= 1.0))   # tanh output range
    print("KERNEL_OK")
</pallas_src>

<mosaic_0001>
module attributes {stable_mosaic.version = 11 : i64} {
  func.func @_fused_kernel(%arg0: i32, %arg1: memref<64x240xbf16, #tpu.memory_space<vmem>>, %arg2: memref<240x8xbf16, #tpu.memory_space<vmem>>, %arg3: memref<1x8xf32, #tpu.memory_space<vmem>>, %arg4: memref<1x8xf32, #tpu.memory_space<vmem>>, %arg5: memref<64x8xf32, #tpu.memory_space<vmem>>) attributes {dimension_semantics = [#tpu.dimension_semantics<parallel>], iteration_bounds = array<i64: 1>, scalar_prefetch = 0 : i64, scratch_operands = 0 : i64, tpu.core_type = #tpu.core_type<tc>, window_params = [{transform_indices = @transform_0, window_bounds = array<i64: 64, 240>}, {pipeline_mode = #tpu.pipeline_mode<synchronous>, transform_indices = @transform_1, window_bounds = array<i64: 240, 8>}, {pipeline_mode = #tpu.pipeline_mode<synchronous>, transform_indices = @transform_2, window_bounds = array<i64: 1, 8>}, {pipeline_mode = #tpu.pipeline_mode<synchronous>, transform_indices = @transform_3, window_bounds = array<i64: 1, 8>}, {transform_indices = @transform_4, window_bounds = array<i64: 64, 8>}]} {
    %c0 = arith.constant 0 : index
    %c0_0 = arith.constant 0 : index
    %0 = vector.load %arg1[%c0, %c0_0] : memref<64x240xbf16, #tpu.memory_space<vmem>>, vector<64x240xbf16>
    %c0_1 = arith.constant 0 : index
    %c0_2 = arith.constant 0 : index
    %1 = vector.load %arg2[%c0_1, %c0_2] : memref<240x8xbf16, #tpu.memory_space<vmem>>, vector<240x8xbf16>
    %cst = arith.constant dense<0.000000e+00> : vector<64x8xf32>
    %2 = tpu.matmul %0, %1, %cst {dimension_numbers = #tpu.dot_dimension_numbers<[1], [0], [0], [1], [0, 0, 1, 1], [], []>} : vector<64x240xbf16>, vector<240x8xbf16>, vector<64x8xf32> -> vector<64x8xf32>
    %c0_3 = arith.constant 0 : index
    %c0_4 = arith.constant 0 : index
    %3 = vector.load %arg3[%c0_3, %c0_4] : memref<1x8xf32, #tpu.memory_space<vmem>>, vector<1x8xf32>
    %4 = vector.broadcast %3 : vector<1x8xf32> to vector<64x8xf32>
    %5 = arith.mulf %2, %4 : vector<64x8xf32>
    %c0_5 = arith.constant 0 : index
    %c0_6 = arith.constant 0 : index
    %6 = vector.load %arg4[%c0_5, %c0_6] : memref<1x8xf32, #tpu.memory_space<vmem>>, vector<1x8xf32>
    %7 = vector.broadcast %6 : vector<1x8xf32> to vector<64x8xf32>
    %8 = arith.addf %5, %7 : vector<64x8xf32>
    %c0_7 = arith.constant 0 : index
    %c0_8 = arith.constant 0 : index
    %9 = vector.load %arg5[%c0_7, %c0_8] : memref<64x8xf32, #tpu.memory_space<vmem>>, vector<64x8xf32>
    tpu.vector_store %arg5[%c0_7, %c0_8], %8 {strides = array<i32>} : memref<64x8xf32, #tpu.memory_space<vmem>>, vector<64x8xf32>,
    return
  }
  func.func @transform_0(%arg0: i32) -> (i32, i32) {
    %c0_i32 = arith.constant 0 : i32
    %c0_i32_0 = arith.constant 0 : i32
    return %arg0, %c0_i32 : i32, i32
  }
  func.func @transform_1(%arg0: i32) -> (i32, i32) {
    %c0_i32 = arith.constant 0 : i32
    %c0_i32_0 = arith.constant 0 : i32
    %c0_i32_1 = arith.constant 0 : i32
    return %c0_i32, %c0_i32_0 : i32, i32
  }
  func.func @transform_2(%arg0: i32) -> (i32, i32) {
    %c0_i32 = arith.constant 0 : i32
    %c0_i32_0 = arith.constant 0 : i32
    %c0_i32_1 = arith.constant 0 : i32
    return %c0_i32, %c0_i32_0 : i32, i32
  }
  func.func @transform_3(%arg0: i32) -> (i32, i32) {
    %c0_i32 = arith.constant 0 : i32
    %c0_i32_0 = arith.constant 0 : i32
    %c0_i32_1 = arith.constant 0 : i32
    return %c0_i32, %c0_i32_0 : i32, i32
  }
  func.func @transform_4(%arg0: i32) -> (i32, i32) {
    %c0_i32 = arith.constant 0 : i32
    %c0_i32_0 = arith.constant 0 : i32
    return %arg0, %c0_i32 : i32, i32
  }
}

</mosaic_0001>

<llo_original>
// kernel: tpu_custom_call.1
$region0: #{tpu_custom_call.1}
  #allocation0 [shape = 'u32[]', space=smem, size = 0x4, offset = 0x4, fixed_abs, tag = 'smem constant byte address 0x4 - core index']
  #allocation1 [shape = 'u32[144,128]{1,0:T(1,128)}', space=vmem, size = 0x12000, scoped, tag = 'internal scratch']
  %s0 = inlined_call_operand.vmem [shape: bf16[64,240], index: 0, kind: input, shape index: {}]
  %s1 = inlined_call_operand.vmem [shape: bf16[240,8], index: 1, kind: input, shape index: {}]
  %s2 = inlined_call_operand.vmem [shape: f32[1,8], index: 2, kind: input, shape index: {}]
  %s3 = inlined_call_operand.vmem [shape: f32[1,8], index: 3, kind: input, shape index: {}]
  %s4 = inlined_call_operand.vmem [shape: f32[64,8], index: 4, kind: output, shape index: {}]
  %s5 = sld [smem:[#allocation0]]
  $region26: #{tpu_custom_call.1} parent=0
    _
  %s7 = ssub.s32 1, %s5
  %s8 = scalar_select 0, %s7, %s5
  // Predicated region
  $region2: #{tpu_custom_call.1} parent=0 // pred_check
    _
  $region3: #{tpu_custom_call.1} parent=0 // pred_check_branch
    %10 = sbr.rel (0) target = $region5
  $region4: #{tpu_custom_call.1} parent=0 // pred_region
    _
  $region5: #{tpu_custom_call.1} parent=0 // pred_fallthru
    _
  // Predicated region
  $region6: #{tpu_custom_call.1} parent=0 // pred_check
    _
  $region7: #{tpu_custom_call.1} parent=0 // pred_check_branch
    %12 = sbr.rel (0) target = $region9
  $region8: #{tpu_custom_call.1} parent=0 // pred_region
    _
  $region9: #{tpu_custom_call.1} parent=0 // pred_fallthru
    _
  // Predicated region
  $region10: #{tpu_custom_call.1} parent=0 // pred_check
    _
  $region11: #{tpu_custom_call.1} parent=0 // pred_check_branch
    %14 = sbr.rel (0) target = $region13
  $region12: #{tpu_custom_call.1} parent=0 // pred_region
    _
  $region13: #{tpu_custom_call.1} parent=0 // pred_fallthru
    _
  // Predicated region
  $region14: #{tpu_custom_call.1} parent=0 // pred_check
    _
  $region15: #{tpu_custom_call.1} parent=0 // pred_check_branch
    %16 = sbr.rel (0) target = $region17
  $region16: #{tpu_custom_call.1} parent=0 // pred_region
    _
  $region17: #{tpu_custom_call.1} parent=0 // pred_fallthru
    _
  %v18 = vld [vmem:[%s0] sm:$0xff]
  %v19 = vld [vmem:[%s0 + $0x8] sm:$0xff]
  %v20 = vld [vmem:[%s0 + $0x10] sm:$0xff]
  %v21 = vld [vmem:[%s0 + $0x18] sm:$0xff]
  %v22 = vld [vmem:[%s0 + $0x20] sm:$0xff]
  %v23 = vld [vmem:[%s0 + $0x28] sm:$0xff]
  %v24 = vld [vmem:[%s0 + $0x30] sm:$0xff]
  %v25 = vld [vmem:[%s0 + $0x38] sm:$0xff]
  %v26 = vld [vmem:[%s1] sm:$0xf]
  %v27 = vld [vmem:[%s1 + $0x4] sm:$0xf]
  %v28 = vld [vmem:[%s1 + $0x8] sm:$0xf]
  %v29 = vld [vmem:[%s1 + $0xc] sm:$0xf]
  %v30 = vld [vmem:[%s1 + $0x10] sm:$0xf]
  %v31 = vld [vmem:[%s1 + $0x14] sm:$0xf]
  %v32 = vld [vmem:[%s1 + $0x18] sm:$0xf]
  %v33 = vld [vmem:[%s1 + $0x1c] sm:$0xf]
  %v34 = vld [vmem:[%s1 + $0x20] sm:$0xf]
  %v35 = vld [vmem:[%s1 + $0x24] sm:$0xf]
  %v36 = vld [vmem:[%s1 + $0x28] sm:$0xf]
  %v37 = vld [vmem:[%s1 + $0x2c] sm:$0xf]
  %v38 = vld [vmem:[%s1 + $0x30] sm:$0xf]
  %v39 = vld [vmem:[%s1 + $0x34] sm:$0xf]
  %v40 = vld [vmem:[%s1 + $0x38] sm:$0xf]
  %v41 = vld [vmem:[%s1 + $0x3c] sm:$0xf]
  %v42 = vld [vmem:[%s1 + $0x40] sm:$0xf]
  %v43 = vld [vmem:[%s1 + $0x44] sm:$0xf]
  %v44 = vld [vmem:[%s1 + $0x48] sm:$0xf]
  %v45 = vld [vmem:[%s1 + $0x4c] sm:$0xf]
  %v46 = vld [vmem:[%s1 + $0x50] sm:$0xf]
  %v47 = vld [vmem:[%s1 + $0x54] sm:$0xf]
  %v48 = vld [vmem:[%s1 + $0x58] sm:$0xf]
  %v49 = vld [vmem:[%s1 + $0x5c] sm:$0xf]
  %v50 = vld [vmem:[%s1 + $0x60] sm:$0xf]
  %v51 = vld [vmem:[%s1 + $0x64] sm:$0xf]
  %v52 = vld [vmem:[%s1 + $0x68] sm:$0xf]
  %v53 = vld [vmem:[%s1 + $0x6c] sm:$0xf]
  %v54 = vld [vmem:[%s1 + $0x70] sm:$0xf]
  %v55 = vld [vmem:[%s1 + $0x74] sm:$0xf]
  %v64 = vunpack.c.l.b16 %v18
  %v65 = vunpack.c.h.b16 %v18
  %v66 = vunpack.c.l.b16 %v19
  %v67 = vunpack.c.h.b16 %v19
  %v68 = vunpack.c.l.b16 %v20
  %v69 = vunpack.c.h.b16 %v20
  %v70 = vunpack.c.l.b16 %v21
  %v71 = vunpack.c.h.b16 %v21
  %v72 = vunpack.c.l.b16 %v22
  %v73 = vunpack.c.h.b16 %v22
  %v74 = vunpack.c.l.b16 %v23
  %v75 = vunpack.c.h.b16 %v23
  %v76 = vunpack.c.l.b16 %v24
  %v77 = vunpack.c.h.b16 %v24
  %v78 = vunpack.c.l.b16 %v25
  %v79 = vunpack.c.h.b16 %v25
  %v80 = vpack.c.b16 %v66, %v64
  %v81 = vpack.c.b16 %v67, %v65
  %v82 = vpack.c.b16 %v70, %v68
  %v83 = vpack.c.b16 %v71, %v69
  %v84 = vpack.c.b16 %v74, %v72
  %v85 = vpack.c.b16 %v75, %v73
  %v86 = vpack.c.b16 %v78, %v76
  %v87 = vpack.c.b16 %v79, %v77
  %v122 = vunpack.c.l.b16 %v26
  %v123 = vunpack.c.l.b16 %v27
  %v124 = vunpack.c.l.b16 %v28
  %v125 = vunpack.c.l.b16 %v29
  %v126 = vunpack.c.l.b16 %v30
  %v127 = vunpack.c.l.b16 %v31
  %v128 = vunpack.c.l.b16 %v32
  %v129 = vunpack.c.l.b16 %v33
  %v130 = vunpack.c.l.b16 %v34
  %v131 = vunpack.c.l.b16 %v35
  %v132 = vunpack.c.l.b16 %v36
  %v133 = vunpack.c.l.b16 %v37
  %v134 = vunpack.c.l.b16 %v38
  %v135 = vunpack.c.l.b16 %v39
  %v136 = vunpack.c.l.b16 %v40
  %v137 = vunpack.c.l.b16 %v41
  %v138 = vunpack.c.l.b16 %v42
  %v139 = vunpack.c.l.b16 %v43
  %v140 = vunpack.c.l.b16 %v44
  %v141 = vunpack.c.l.b16 %v45
  %v142 = vunpack.c.l.b16 %v46
  %v143 = vunpack.c.l.b16 %v47
  %v144 = vunpack.c.l.b16 %v48
  %v145 = vunpack.c.l.b16 %v49
  %v146 = vunpack.c.l.b16 %v50
  %v147 = vunpack.c.l.b16 %v51
  %v148 = vunpack.c.l.b16 %v52
  %v149 = vunpack.c.l.b16 %v53
  %v150 = vunpack.c.l.b16 %v54
  %v151 = vunpack.c.l.b16 %v55
  %v152 = vpack.c.b16 %v123, %v122
  %v153 = vpack.c.b16 %v125, %v124
  %v154 = vpack.c.b16 %v127, %v126
  %v155 = vpack.c.b16 %v129, %v128
  %v156 = vpack.c.b16 %v131, %v130
  %v157 = vpack.c.b16 %v133, %v132
  %v158 = vpack.c.b16 %v135, %v134
  %v159 = vpack.c.b16 %v137, %v136
  %v160 = vpack.c.b16 %v139, %v138
  %v161 = vpack.c.b16 %v141, %v140
  %v162 = vpack.c.b16 %v143, %v142
  %v163 = vpack.c.b16 %v145, %v144
  %v164 = vpack.c.b16 %v147, %v146
  %v165 = vpack.c.b16 %v149, %v148
  %v166 = vpack.c.b16 %v151, %v150
  %vm182 = vcmask 916480
  %v184 = vsel %vm182, %v81, 0
  %v187 = vsel %vm182, %v83, 0
  %v190 = vsel %vm182, %v85, 0
  %v193 = vsel %vm182, %v87, 0
  %195 = vmatprep.subr.bf16.mxu0 0
  %196 = vmatpush1.bf16.msra.mxu0 %v152
  %197 = vmatprep.subr.bf16.mxu0 0
  %198 = vmatpush1.bf16.msra.mxu0 %v153
  %199 = vmatprep.subr.bf16.mxu0 0
  %200 = vmatpush1.bf16.msra.mxu0 %v154
  %201 = vmatprep.subr.bf16.mxu0 0
  %202 = vmatpush1.bf16.msra.mxu0 %v155
  %203 = vmatprep.subr.bf16.mxu0 0
  %204 = vmatpush1.bf16.msra.mxu0 %v156
  %205 = vmatprep.subr.bf16.mxu0 0
  %206 = vmatpush1.bf16.msra.mxu0 %v157
  %207 = vmatprep.subr.bf16.mxu0 0
  %208 = vmatpush1.bf16.msra.mxu0 %v158
  %209 = vmatprep.subr.bf16.mxu0 0
  %210 = vmatpush1.bf16.msra.mxu0 %v159
  %211 = vmatprep.subr.bf16.mxu0 0
  %212 = vmatpush1.bf16.msra.mxu0 %v160
  %213 = vmatprep.subr.bf16.mxu0 0
  %214 = vmatpush1.bf16.msra.mxu0 %v161
  %215 = vmatprep.subr.bf16.mxu0 0
  %216 = vmatpush1.bf16.msra.mxu0 %v162
  %217 = vmatprep.subr.bf16.mxu0 0
  %218 = vmatpush1.bf16.msra.mxu0 %v163
  %219 = vmatprep.subr.bf16.mxu0 0
  %220 = vmatpush1.bf16.msra.mxu0 %v164
  %221 = vmatprep.subr.bf16.mxu0 0
  %222 = vmatpush1.bf16.msra.mxu0 %v165
  %223 = vmatprep.subr.bf16.mxu0 0
  %224 = vmatpush1.bf16.msra.mxu0 %v166
  %225 = vmatprep.subr.bf16.mxu0 0
  %226 = vmatpush1.bf16.msra.mxu0 0
  %227 = vmatprep.mubr.bf16.mxu0 %v184
  %228 = vmatmul.mubr.bf16.gmra.mrb[0].mxu0 %v80
  %v229 = vpop.f32.mrb[0].mxu0
  %v230 = vadd.f32 0.0, %v229
  %v231 = vpop.f32.mrb[0].mxu0
  %v232 = vpop.f32.mrb[0].mxu0
  %v233 = vadd.f32 0.0, %v232
  %v234 = vpop.f32.mrb[0].mxu0
  %235 = vmatprep.mubr.bf16.mxu0 %v187
  %236 = vmatmul.mubr.bf16.gmra.mrb[0].mxu0 %v82
  %v237 = vpop.f32.mrb[0].mxu0
  %v238 = vadd.f32 0.0, %v237
  %v239 = vpop.f32.mrb[0].mxu0
  %v240 = vpop.f32.mrb[0].mxu0
  %v241 = vadd.f32 0.0, %v240
  %v242 = vpop.f32.mrb[0].mxu0
  %243 = vmatprep.mubr.bf16.mxu0 %v190
  %244 = vmatmul.mubr.bf16.gmra.mrb[0].mxu0 %v84
  %v245 = vpop.f32.mrb[0].mxu0
  %v246 = vadd.f32 0.0, %v245
  %v247 = vpop.f32.mrb[0].mxu0
  %v248 = vpop.f32.mrb[0].mxu0
  %v249 = vadd.f32 0.0, %v248
  %v250 = vpop.f32.mrb[0].mxu0
  %251 = vmatprep.mubr.bf16.mxu0 %v193
  %252 = vmatmul.mubr.bf16.gmra.mrb[0].mxu0 %v86
  %v253 = vpop.f32.mrb[0].mxu0
  %v254 = vadd.f32 0.0, %v253
  %v255 = vpop.f32.mrb[0].mxu0
  %v256 = vpop.f32.mrb[0].mxu0
  %v257 = vadd.f32 0.0, %v256
  %v258 = vpop.f32.mrb[0].mxu0
  %259 = vdwg.mxu0
  %v260 = vld [vmem:[%s2] sm:$0x1]
  %v262 = vlaneseq
  %v263 = vshrl.u32 %v262, 7
  %v264 = vsub.s32 0, %v263
  %v265 = vrot.slane %v260, %v264
  %v267 = vmul.f32 %v230, %v265
  %v268 = vmul.f32 %v233, %v265
  %v269 = vmul.f32 %v238, %v265
  %v270 = vmul.f32 %v241, %v265
  %v271 = vmul.f32 %v246, %v265
  %v272 = vmul.f32 %v249, %v265
  %v273 = vmul.f32 %v254, %v265
  %v274 = vmul.f32 %v257, %v265
  %v275 = vld [vmem:[%s3] sm:$0x1]
  %v277 = vlaneseq
  %v278 = vshrl.u32 %v277, 7
  %v279 = vsub.s32 0, %v278
  %v280 = vrot.slane %v275, %v279
  %v282 = vadd.f32 %v267, %v280
  %v283 = vadd.f32 %v268, %v280
  %v284 = vadd.f32 %v269, %v280
  %v285 = vadd.f32 %v270, %v280
  %v286 = vadd.f32 %v271, %v280
  %v287 = vadd.f32 %v272, %v280
  %v288 = vadd.f32 %v273, %v280
  %v289 = vadd.f32 %v274, %v280
  %vm290 = vcmask 64512
  %291 = vst.msk [vmem:[%s4] sm:$0xff] %vm290, %v282
  %292 = vst.msk [vmem:[%s4 + $0x8] sm:$0xff] %vm290, %v283
  %293 = vst.msk [vmem:[%s4 + $0x10] sm:$0xff] %vm290, %v284
  %294 = vst.msk [vmem:[%s4 + $0x18] sm:$0xff] %vm290, %v285
  %295 = vst.msk [vmem:[%s4 + $0x20] sm:$0xff] %vm290, %v286
  %296 = vst.msk [vmem:[%s4 + $0x28] sm:$0xff] %vm290, %v287
  %297 = vst.msk [vmem:[%s4 + $0x30] sm:$0xff] %vm290, %v288
  %298 = vst.msk [vmem:[%s4 + $0x38] sm:$0xff] %vm290, %v289
  // Predicated region
  $region18: #{tpu_custom_call.1} parent=0 // pred_check
    _
  $region19: #{tpu_custom_call.1} parent=0 // pred_check_branch
    %300 = sbr.rel (0) target = $region21
  $region20: #{tpu_custom_call.1} parent=0 // pred_region
    _
  $region21: #{tpu_custom_call.1} parent=0 // pred_fallthru
    _
  // Predicated region
  $region22: #{tpu_custom_call.1} parent=0 // pred_check
    _
  $region23: #{tpu_custom_call.1} parent=0 // pred_check_branch
    %302 = sbr.rel (0) target = $region25
  $region24: #{tpu_custom_call.1} parent=0 // pred_region
    _
  $region25: #{tpu_custom_call.1} parent=0 // pred_fallthru
    _

</llo_original>
